<compile_context>
chip_gen: v6e
topology: v6e:2x2x1
jax: 0.10.0
libtpu: 0.0.40
codegen_flags: <defaults>
</compile_context>

<pallas_src>
import functools

import jax
import jax.numpy as jnp
from jax import lax
from jax.experimental import pallas as pl
from jax.experimental.pallas import tpu as pltpu


def _round_up(x, m):
    return ((x + m - 1) // m) * m


def _largest_divisor_leq(n, cap):
    for d in range(min(cap, n), 0, -1):
        if n % d == 0:
            return d
    return 1


def _bidir_rnn_kernel(x_f_ref, x_b_ref, wih_f_ref, wih_b_ref, whh_ref, b_ref,
                      out_ref, xwf_ref, xwb_ref, *, Tc, Bpad, Hpad, cdtype):
    """One time-chunk of the fused forward+backward tanh-RNN recurrence.

    x_f_ref : (Tc*Bpad, D)      forward-order chunk i of time-major x
    x_b_ref : (Tc*Bpad, D)      chunk nc-1-i of x (backward direction's chunk,
                                natural local order; reversal happens by
                                reading local index Tc-1-tl in the loop)
    wih_*   : (D, Hpad)         per-direction input weights (compute dtype)
    whh_ref : (2*Hpad, 2*Hpad)  block-diagonal [W_hh_fw (+) W_hh_bw]
    b_ref   : (1, 2*Hpad)       [b_fw | b_bw] (f32)
    out_ref : (Bpad, 2*Hpad)    resident carry [h_fw | h_bw]; also the output
    xw*_ref : (Tc*Bpad, Hpad)   f32 scratch: this chunk's input projections
    """
    i = pl.program_id(0)

    @pl.when(i == 0)
    def _():
        out_ref[...] = jnp.zeros_like(out_ref)

    # Per-chunk hoisted input projection (outside the serial dependence chain).
    xwf_ref[...] = (
        jnp.dot(x_f_ref[...], wih_f_ref[...], preferred_element_type=jnp.float32)
        + b_ref[:, :Hpad])
    xwb_ref[...] = (
        jnp.dot(x_b_ref[...], wih_b_ref[...], preferred_element_type=jnp.float32)
        + b_ref[:, Hpad:])

    whh = whh_ref[...]  # hoisted load of the block-diagonal recurrent weights

    def step(tl, h):
        # Sublane-aligned full-tile slices (Bpad is a multiple of 8/16).
        rf = pl.multiple_of(tl * Bpad, Bpad)
        rb = pl.multiple_of((Tc - 1 - tl) * Bpad, Bpad)
        pre = jnp.concatenate(
            [xwf_ref[pl.ds(rf, Bpad), :], xwb_ref[pl.ds(rb, Bpad), :]], axis=-1)
        # Single 2*Hpad-wide contraction per step (both directions at once),
        # bf16 operands with f32 accumulation; carried h stays f32.
        hh = jnp.dot(h.astype(cdtype), whh, preferred_element_type=jnp.float32)
        return jnp.tanh(pre + hh)

    h = lax.fori_loop(0, Tc, step, out_ref[...], unroll=min(Tc, 8))
    out_ref[...] = h


@functools.partial(jax.jit, static_argnames=("hid_size", "max_time_chunk"))
def bidir_rnn_last_hidden(x_btd, wih_f, wih_b, whh_blk, b_cat, *, hid_size,
                          max_time_chunk):
    """Run both directional recurrences in one fused, time-chunked kernel.

    Returns (h_n_forward, h_n_backward), each (B, hid_size) float32.
    """
    B, T, D = x_btd.shape
    Hpad = wih_f.shape[1]
    cdtype = wih_f.dtype
    itemsize = jnp.dtype(cdtype).itemsize
    sublane = 8 if itemsize >= 4 else (16 if itemsize == 2 else 32)
    Bpad = _round_up(B, sublane)
    Tc = _largest_divisor_leq(T, max_time_chunk)   # no time padding needed
    nc = T // Tc

    # One-time layout copy: time-major + batch padded to a sublane multiple so
    # every per-step slice inside the kernel is a full aligned tile.  Under jit
    # the cast/transpose/pad/reshape fuse into a single copy.
    x = jnp.transpose(x_btd.astype(cdtype), (1, 0, 2))     # (T, B, D)
    if Bpad != B:
        x = jnp.pad(x, ((0, 0), (0, Bpad - B), (0, 0)))
    x = x.reshape(T * Bpad, D)                              # (T*Bpad, D)

    # VMEM budget: 2 streamed x inputs (double-buffered) + projection scratch
    # + weights + bias + output/carry, with >=50% headroom (clamped for v7x).
    vmem_budget = (2 * 2 * Tc * Bpad * D * itemsize
                   + 2 * Tc * Bpad * Hpad * 4
                   + 2 * D * Hpad * itemsize
                   + (2 * Hpad) ** 2 * itemsize
                   + 2 * Hpad * 4
                   + 2 * Bpad * 2 * Hpad * 4)
    vmem_limit = int(min(max(vmem_budget * 1.5 + (1 << 20), 8 << 20), 48 << 20))

    kernel = functools.partial(_bidir_rnn_kernel, Tc=Tc, Bpad=Bpad, Hpad=Hpad,
                               cdtype=cdtype)
    out = pl.pallas_call(
        kernel,
        out_shape=jax.ShapeDtypeStruct((Bpad, 2 * Hpad), jnp.float32),
        grid=(nc,),
        in_specs=[
            pl.BlockSpec((Tc * Bpad, D), lambda i: (i, 0)),           # fwd chunk
            pl.BlockSpec((Tc * Bpad, D), lambda i: (nc - 1 - i, 0)),  # bwd chunk
            pl.BlockSpec((D, Hpad), lambda i: (0, 0)),                # W_ih_fw
            pl.BlockSpec((D, Hpad), lambda i: (0, 0)),                # W_ih_bw
            pl.BlockSpec((2 * Hpad, 2 * Hpad), lambda i: (0, 0)),     # W_hh blk
            pl.BlockSpec((1, 2 * Hpad), lambda i: (0, 0)),            # bias
        ],
        out_specs=pl.BlockSpec((Bpad, 2 * Hpad), lambda i: (0, 0)),
        scratch_shapes=[pltpu.VMEM((Tc * Bpad, Hpad), jnp.float32),
                        pltpu.VMEM((Tc * Bpad, Hpad), jnp.float32)],
        compiler_params=pltpu.CompilerParams(
            dimension_semantics=("arbitrary",),
            vmem_limit_bytes=vmem_limit),
    )(x, x, wih_f, wih_b, whh_blk, b_cat)

    h_fw = out[:B, :hid_size]
    h_bw = out[:B, Hpad:Hpad + hid_size]
    return h_fw, h_bw


def reverse_tensor(x_btd):
    # reverse along the time axis (axis=1 of [B, T, D])
    return x_btd[:, ::-1, :]


def _pad_lanes(w, hpad):
    h = w.shape[-1]
    return jnp.pad(w.astype(jnp.float32), ((0, 0), (0, hpad - h)))


def _pad_square(w, hpad):
    h = w.shape[0]
    return jnp.pad(w.astype(jnp.float32), ((0, hpad - h), (0, hpad - h)))


class Model:
    def __init__(self, input_size, rnn_hid_size, impute_weight=1,
                 label_weight=1, key=None, compute_dtype=jnp.bfloat16,
                 max_time_chunk=128, populate_backward_values=True):
        self.input_size = input_size
        self.rnn_hid_size = rnn_hid_size
        self.impute_weight = impute_weight
        self.label_weight = label_weight
        self.compute_dtype = compute_dtype
        self.max_time_chunk = max_time_chunk
        # Gate for the PyTorch dict side-effect (never read by the kernel);
        # set False to save a full extra HBM read+write of x per call.
        self.populate_backward_values = populate_backward_values
        # pad hidden dim up to a lane-dense multiple of 128 (per direction)
        self.hpad = _round_up(rnn_hid_size, 128)

        key = jax.random.PRNGKey(0) if key is None else key
        ks = jax.random.split(key, 6)
        scale = 1.0 / jnp.sqrt(jnp.float32(rnn_hid_size))

        def init(k, shape):
            return jax.random.uniform(k, shape, jnp.float32, -1.0, 1.0) * scale

        # raw (unpadded, f32) parameters for the two directional cells
        self.params = {
            'fw': {
                'w_ih': init(ks[0], (input_size, rnn_hid_size)),
                'w_hh': init(ks[1], (rnn_hid_size, rnn_hid_size)),
                'b':    init(ks[2], (1, rnn_hid_size)),
            },
            'bw': {
                'w_ih': init(ks[3], (input_size, rnn_hid_size)),
                'w_hh': init(ks[4], (rnn_hid_size, rnn_hid_size)),
                'b':    init(ks[5], (1, rnn_hid_size)),
            },
        }

        # Prepared once (not per __call__): lane-padded, compute-dtype weights.
        #   W_ih_*  : (D, Hpad)           per direction (compute dtype)
        #   W_hh    : (2*Hpad, 2*Hpad)    block-diagonal [fw (+) bw] (compute dtype)
        #   b_cat   : (1, 2*Hpad)         [fw | bw] (f32; added after f32 accum)
        # Padded lanes stay exactly zero through the recurrence (tanh(0)=0).
        hp = self.hpad
        p_f, p_b = self.params['fw'], self.params['bw']
        self._wih_f = _pad_lanes(p_f['w_ih'], hp).astype(compute_dtype)
        self._wih_b = _pad_lanes(p_b['w_ih'], hp).astype(compute_dtype)
        whh_blk = jnp.zeros((2 * hp, 2 * hp), jnp.float32)
        whh_blk = whh_blk.at[:hp, :hp].set(_pad_square(p_f['w_hh'], hp))
        whh_blk = whh_blk.at[hp:, hp:].set(_pad_square(p_b['w_hh'], hp))
        self._whh_blk = whh_blk.astype(compute_dtype)
        self._b_cat = jnp.concatenate(
            [_pad_lanes(p_f['b'], hp), _pad_lanes(p_b['b'], hp)], axis=1)

    def __call__(self, data):
        x_fwd = data['forward']['values']                 # [B, T, D]
        if self.populate_backward_values:
            # PyTorch-module side effect; the kernel does its own reversal via
            # the backward-chunk index_map, so this copy is never read by it.
            data['backward']['values'] = reverse_tensor(x_fwd)
        ret_f, ret_b = bidir_rnn_last_hidden(
            x_fwd, self._wih_f, self._wih_b, self._whh_blk, self._b_cat,
            hid_size=self.rnn_hid_size, max_time_chunk=self.max_time_chunk)
        return {'h_n_forward': ret_f, 'h_n_backward': ret_b}


def _ref_last_hidden(x_btd, w_ih, w_hh, b):
    """Pure-JAX f32 reference for one direction (plain tanh-RNN, h0 = 0)."""
    x_tbd = jnp.transpose(x_btd, (1, 0, 2)).astype(jnp.float32)

    def step(h, x_t):
        h = jnp.tanh(x_t @ w_ih + h @ w_hh + b)
        return h, None

    h0 = jnp.zeros((x_btd.shape[0], w_hh.shape[0]), jnp.float32)
    h_n, _ = lax.scan(step, h0, x_tbd)
    return h_n


if __name__ == "__main__":
    B, T, D, H = 2, 8, 4, 32  # batch, seq len, input_size, rnn_hid_size

    key = jax.random.PRNGKey(0)
    k_x, k_m = jax.random.split(key)
    values = jax.random.normal(k_x, (B, T, D), jnp.float32)

    data = {
        'forward': {'values': values},
        'backward': {},  # filled by Model.__call__ (reverse_tensor)
    }

    # Pure-JAX reference (forward uses x, backward uses reversed x).
    ref_model = Model(input_size=D, rnn_hid_size=H, key=k_m)
    p_f, p_b = ref_model.params['fw'], ref_model.params['bw']
    ref_f = _ref_last_hidden(values, p_f['w_ih'], p_f['w_hh'], p_f['b'])
    ref_b = _ref_last_hidden(reverse_tensor(values),
                             p_b['w_ih'], p_b['w_hh'], p_b['b'])

    # --- strict f32 run: validates the chunked grid / reversal / carried h ---
    # max_time_chunk=4 => two grid steps at T=8, exercising the carry path.
    m32 = Model(input_size=D, rnn_hid_size=H, key=k_m,
                compute_dtype=jnp.float32, max_time_chunk=4)
    o32 = m32(data)
    hf32 = jax.block_until_ready(o32['h_n_forward'])
    hb32 = jax.block_until_ready(o32['h_n_backward'])
    assert hf32.shape == (B, H) and hb32.shape == (B, H)
    assert jnp.all(jnp.isfinite(hf32)) and jnp.all(jnp.isfinite(hb32))
    assert jnp.allclose(hf32, ref_f, rtol=1e-3, atol=1e-3)
    assert jnp.allclose(hb32, ref_b, rtol=1e-3, atol=1e-3)

    # --- default bf16 run (MXU-native path); looser tolerance for bf16 ---
    m16 = Model(input_size=D, rnn_hid_size=H, key=k_m, max_time_chunk=4)
    o16 = m16(data)
    hf16 = jax.block_until_ready(o16['h_n_forward'])
    hb16 = jax.block_until_ready(o16['h_n_backward'])
    assert hf16.shape == (B, H) and hb16.shape == (B, H)
    assert jnp.all(jnp.isfinite(hf16)) and jnp.all(jnp.isfinite(hb16))
    assert jnp.allclose(hf16, ref_f, rtol=3e-2, atol=3e-2)
    assert jnp.allclose(hb16, ref_b, rtol=3e-2, atol=3e-2)

    # dict side-effect parity with the PyTorch module
    assert jnp.allclose(data['backward']['values'], values[:, ::-1, :])

    print("KERNEL_OK")
</pallas_src>

<mosaic_0001>
module attributes {stable_mosaic.version = 11 : i64} {
  func.func @_bidir_rnn_kernel(%arg0: i32, %arg1: memref<32x4xf32, #tpu.memory_space<vmem>>, %arg2: memref<32x4xf32, #tpu.memory_space<vmem>>, %arg3: memref<4x128xf32, #tpu.memory_space<vmem>>, %arg4: memref<4x128xf32, #tpu.memory_space<vmem>>, %arg5: memref<256x256xf32, #tpu.memory_space<vmem>>, %arg6: memref<1x256xf32, #tpu.memory_space<vmem>>, %arg7: memref<8x256xf32, #tpu.memory_space<vmem>>, %arg8: memref<32x128xf32, #tpu.memory_space<vmem>>, %arg9: memref<32x128xf32, #tpu.memory_space<vmem>>) attributes {dimension_semantics = [#tpu.dimension_semantics<arbitrary>], iteration_bounds = array<i64: 2>, scalar_prefetch = 0 : i64, scratch_operands = 2 : i64, tpu.core_type = #tpu.core_type<tc>, window_params = [{transform_indices = @transform_0, window_bounds = array<i64: 32, 4>}, {transform_indices = @transform_1, window_bounds = array<i64: 32, 4>}, {pipeline_mode = #tpu.pipeline_mode<synchronous>, transform_indices = @transform_2, window_bounds = array<i64: 4, 128>}, {pipeline_mode = #tpu.pipeline_mode<synchronous>, transform_indices = @transform_3, window_bounds = array<i64: 4, 128>}, {pipeline_mode = #tpu.pipeline_mode<synchronous>, transform_indices = @transform_4, window_bounds = array<i64: 256, 256>}, {pipeline_mode = #tpu.pipeline_mode<synchronous>, transform_indices = @transform_5, window_bounds = array<i64: 1, 256>}, {pipeline_mode = #tpu.pipeline_mode<synchronous>, transform_indices = @transform_6, window_bounds = array<i64: 8, 256>}]} {
    %c0_i32 = arith.constant 0 : i32
    %0 = arith.cmpi eq, %arg0, %c0_i32 : i32
    %1 = arith.extui %0 : i1 to i32
    %c0_i32_0 = arith.constant 0 : i32
    %2 = arith.cmpi ne, %1, %c0_i32_0 : i32
    scf.if %2 {
      %cst_46 = arith.constant 0.000000e+00 : f32
      %72 = vector.broadcast %cst_46 : f32 to vector<8x256xf32>
      %c0_47 = arith.constant 0 : index
      %c0_48 = arith.constant 0 : index
      %73 = vector.load %arg7[%c0_47, %c0_48] : memref<8x256xf32, #tpu.memory_space<vmem>>, vector<8x256xf32>
      tpu.vector_store %arg7[%c0_47, %c0_48], %72 {strides = array<i32>} : memref<8x256xf32, #tpu.memory_space<vmem>>, vector<8x256xf32>,
    } else {
    }
    %c0 = arith.constant 0 : index
    %c0_1 = arith.constant 0 : index
    %3 = vector.load %arg1[%c0, %c0_1] : memref<32x4xf32, #tpu.memory_space<vmem>>, vector<32x4xf32>
    %c0_2 = arith.constant 0 : index
    %c0_3 = arith.constant 0 : index
    %4 = vector.load %arg3[%c0_2, %c0_3] : memref<4x128xf32, #tpu.memory_space<vmem>>, vector<4x128xf32>
    %cst = arith.constant dense<0.000000e+00> : vector<32x128xf32>
    %5 = tpu.matmul %3, %4, %cst {dimension_numbers = #tpu.dot_dimension_numbers<[1], [0], [0], [1], [0, 0, 1, 1], [], []>} : vector<32x4xf32>, vector<4x128xf32>, vector<32x128xf32> -> vector<32x128xf32>
    %c0_4 = arith.constant 0 : index
    %c0_5 = arith.constant 0 : index
    %6 = vector.load %arg6[%c0_4, %c0_5] : memref<1x256xf32, #tpu.memory_space<vmem>>, vector<1x128xf32>
    %7 = vector.broadcast %6 : vector<1x128xf32> to vector<32x128xf32>
    %8 = arith.addf %5, %7 : vector<32x128xf32>
    %c0_6 = arith.constant 0 : index
    %c0_7 = arith.constant 0 : index
    %9 = vector.load %arg8[%c0_6, %c0_7] : memref<32x128xf32, #tpu.memory_space<vmem>>, vector<32x128xf32>
    tpu.vector_store %arg8[%c0_6, %c0_7], %8 {strides = array<i32>} : memref<32x128xf32, #tpu.memory_space<vmem>>, vector<32x128xf32>,
    %c0_8 = arith.constant 0 : index
    %c0_9 = arith.constant 0 : index
    %10 = vector.load %arg2[%c0_8, %c0_9] : memref<32x4xf32, #tpu.memory_space<vmem>>, vector<32x4xf32>
    %c0_10 = arith.constant 0 : index
    %c0_11 = arith.constant 0 : index
    %11 = vector.load %arg4[%c0_10, %c0_11] : memref<4x128xf32, #tpu.memory_space<vmem>>, vector<4x128xf32>
    %cst_12 = arith.constant dense<0.000000e+00> : vector<32x128xf32>
    %12 = tpu.matmul %10, %11, %cst_12 {dimension_numbers = #tpu.dot_dimension_numbers<[1], [0], [0], [1], [0, 0, 1, 1], [], []>} : vector<32x4xf32>, vector<4x128xf32>, vector<32x128xf32> -> vector<32x128xf32>
    %c0_13 = arith.constant 0 : index
    %c128 = arith.constant 128 : index
    %13 = vector.load %arg6[%c0_13, %c128] : memref<1x256xf32, #tpu.memory_space<vmem>>, vector<1x128xf32>
    %14 = vector.broadcast %13 : vector<1x128xf32> to vector<32x128xf32>
    %15 = arith.addf %12, %14 : vector<32x128xf32>
    %c0_14 = arith.constant 0 : index
    %c0_15 = arith.constant 0 : index
    %16 = vector.load %arg9[%c0_14, %c0_15] : memref<32x128xf32, #tpu.memory_space<vmem>>, vector<32x128xf32>
    tpu.vector_store %arg9[%c0_14, %c0_15], %15 {strides = array<i32>} : memref<32x128xf32, #tpu.memory_space<vmem>>, vector<32x128xf32>,
    %c0_16 = arith.constant 0 : index
    %c0_17 = arith.constant 0 : index
    %17 = vector.load %arg5[%c0_16, %c0_17] : memref<256x256xf32, #tpu.memory_space<vmem>>, vector<256x256xf32>
    %c0_18 = arith.constant 0 : index
    %c0_19 = arith.constant 0 : index
    %18 = vector.load %arg7[%c0_18, %c0_19] : memref<8x256xf32, #tpu.memory_space<vmem>>, vector<8x256xf32>
    %c0_i32_20 = arith.constant 0 : i32
    %c8_i32 = arith.constant 8 : i32
    %19 = arith.muli %c0_i32_20, %c8_i32 : i32
    %20 = tpu.assume_multiple %19, 8 : i32
    %c3_i32 = arith.constant 3 : i32
    %21 = arith.subi %c3_i32, %c0_i32_20 : i32
    %c8_i32_21 = arith.constant 8 : i32
    %22 = arith.muli %21, %c8_i32_21 : i32
    %23 = tpu.assume_multiple %22, 8 : i32
    %24 = arith.index_cast %20 : i32 to index
    %c0_22 = arith.constant 0 : index
    %25 = vector.load %arg8[%24, %c0_22] : memref<32x128xf32, #tpu.memory_space<vmem>>, vector<8x128xf32>
    %26 = arith.index_cast %23 : i32 to index
    %c0_23 = arith.constant 0 : index
    %27 = vector.load %arg9[%26, %c0_23] : memref<32x128xf32, #tpu.memory_space<vmem>>, vector<8x128xf32>
    %28 = tpu.concatenate %25, %27 in 1 : vector<8x128xf32>, vector<8x128xf32> -> vector<8x256xf32>
    %cst_24 = arith.constant dense<0.000000e+00> : vector<8x256xf32>
    %29 = tpu.matmul %18, %17, %cst_24 {dimension_numbers = #tpu.dot_dimension_numbers<[1], [0], [0], [1], [0, 0, 1, 1], [], []>} : vector<8x256xf32>, vector<256x256xf32>, vector<8x256xf32> -> vector<8x256xf32>
    %30 = arith.addf %28, %29 : vector<8x256xf32>
    %31 = math.tanh %30 : vector<8x256xf32>
    %c1_i32 = arith.constant 1 : i32
    %c8_i32_25 = arith.constant 8 : i32
    %32 = arith.muli %c1_i32, %c8_i32_25 : i32
    %33 = tpu.assume_multiple %32, 8 : i32
    %c3_i32_26 = arith.constant 3 : i32
    %34 = arith.subi %c3_i32_26, %c1_i32 : i32
    %c8_i32_27 = arith.constant 8 : i32
    %35 = arith.muli %34, %c8_i32_27 : i32
    %36 = tpu.assume_multiple %35, 8 : i32
    %37 = arith.index_cast %33 : i32 to index
    %c0_28 = arith.constant 0 : index
    %38 = vector.load %arg8[%37, %c0_28] : memref<32x128xf32, #tpu.memory_space<vmem>>, vector<8x128xf32>
    %39 = arith.index_cast %36 : i32 to index
    %c0_29 = arith.constant 0 : index
    %40 = vector.load %arg9[%39, %c0_29] : memref<32x128xf32, #tpu.memory_space<vmem>>, vector<8x128xf32>
    %41 = tpu.concatenate %38, %40 in 1 : vector<8x128xf32>, vector<8x128xf32> -> vector<8x256xf32>
    %cst_30 = arith.constant dense<0.000000e+00> : vector<8x256xf32>
    %42 = tpu.matmul %31, %17, %cst_30 {dimension_numbers = #tpu.dot_dimension_numbers<[1], [0], [0], [1], [0, 0, 1, 1], [], []>} : vector<8x256xf32>, vector<256x256xf32>, vector<8x256xf32> -> vector<8x256xf32>
    %43 = arith.addf %41, %42 : vector<8x256xf32>
    %44 = math.tanh %43 : vector<8x256xf32>
    %c2_i32 = arith.constant 2 : i32
    %c8_i32_31 = arith.constant 8 : i32
    %45 = arith.muli %c2_i32, %c8_i32_31 : i32
    %46 = tpu.assume_multiple %45, 8 : i32
    %c3_i32_32 = arith.constant 3 : i32
    %47 = arith.subi %c3_i32_32, %c2_i32 : i32
    %c8_i32_33 = arith.constant 8 : i32
    %48 = arith.muli %47, %c8_i32_33 : i32
    %49 = tpu.assume_multiple %48, 8 : i32
    %50 = arith.index_cast %46 : i32 to index
    %c0_34 = arith.constant 0 : index
    %51 = vector.load %arg8[%50, %c0_34] : memref<32x128xf32, #tpu.memory_space<vmem>>, vector<8x128xf32>
    %52 = arith.index_cast %49 : i32 to index
    %c0_35 = arith.constant 0 : index
    %53 = vector.load %arg9[%52, %c0_35] : memref<32x128xf32, #tpu.memory_space<vmem>>, vector<8x128xf32>
    %54 = tpu.concatenate %51, %53 in 1 : vector<8x128xf32>, vector<8x128xf32> -> vector<8x256xf32>
    %cst_36 = arith.constant dense<0.000000e+00> : vector<8x256xf32>
    %55 = tpu.matmul %44, %17, %cst_36 {dimension_numbers = #tpu.dot_dimension_numbers<[1], [0], [0], [1], [0, 0, 1, 1], [], []>} : vector<8x256xf32>, vector<256x256xf32>, vector<8x256xf32> -> vector<8x256xf32>
    %56 = arith.addf %54, %55 : vector<8x256xf32>
    %57 = math.tanh %56 : vector<8x256xf32>
    %c3_i32_37 = arith.constant 3 : i32
    %c8_i32_38 = arith.constant 8 : i32
    %58 = arith.muli %c3_i32_37, %c8_i32_38 : i32
    %59 = tpu.assume_multiple %58, 8 : i32
    %c3_i32_39 = arith.constant 3 : i32
    %60 = arith.subi %c3_i32_39, %c3_i32_37 : i32
    %c8_i32_40 = arith.constant 8 : i32
    %61 = arith.muli %60, %c8_i32_40 : i32
    %62 = tpu.assume_multiple %61, 8 : i32
    %63 = arith.index_cast %59 : i32 to index
    %c0_41 = arith.constant 0 : index
    %64 = vector.load %arg8[%63, %c0_41] : memref<32x128xf32, #tpu.memory_space<vmem>>, vector<8x128xf32>
    %65 = arith.index_cast %62 : i32 to index
    %c0_42 = arith.constant 0 : index
    %66 = vector.load %arg9[%65, %c0_42] : memref<32x128xf32, #tpu.memory_space<vmem>>, vector<8x128xf32>
    %67 = tpu.concatenate %64, %66 in 1 : vector<8x128xf32>, vector<8x128xf32> -> vector<8x256xf32>
    %cst_43 = arith.constant dense<0.000000e+00> : vector<8x256xf32>
    %68 = tpu.matmul %57, %17, %cst_43 {dimension_numbers = #tpu.dot_dimension_numbers<[1], [0], [0], [1], [0, 0, 1, 1], [], []>} : vector<8x256xf32>, vector<256x256xf32>, vector<8x256xf32> -> vector<8x256xf32>
    %69 = arith.addf %67, %68 : vector<8x256xf32>
    %70 = math.tanh %69 : vector<8x256xf32>
    %c4_i32 = arith.constant 4 : i32
    %c0_44 = arith.constant 0 : index
    %c0_45 = arith.constant 0 : index
    %71 = vector.load %arg7[%c0_44, %c0_45] : memref<8x256xf32, #tpu.memory_space<vmem>>, vector<8x256xf32>
    tpu.vector_store %arg7[%c0_44, %c0_45], %70 {strides = array<i32>} : memref<8x256xf32, #tpu.memory_space<vmem>>, vector<8x256xf32>,
    return
  }
  func.func @transform_0(%arg0: i32) -> (i32, i32) {
    %c0_i32 = arith.constant 0 : i32
    %c0_i32_0 = arith.constant 0 : i32
    return %arg0, %c0_i32 : i32, i32
  }
  func.func @transform_1(%arg0: i32) -> (i32, i32) {
    %c1_i32 = arith.constant 1 : i32
    %0 = arith.subi %c1_i32, %arg0 : i32
    %c0_i32 = arith.constant 0 : i32
    %c0_i32_0 = arith.constant 0 : i32
    return %0, %c0_i32 : i32, i32
  }
  func.func @transform_2(%arg0: i32) -> (i32, i32) {
    %c0_i32 = arith.constant 0 : i32
    %c0_i32_0 = arith.constant 0 : i32
    %c0_i32_1 = arith.constant 0 : i32
    return %c0_i32, %c0_i32_0 : i32, i32
  }
  func.func @transform_3(%arg0: i32) -> (i32, i32) {
    %c0_i32 = arith.constant 0 : i32
    %c0_i32_0 = arith.constant 0 : i32
    %c0_i32_1 = arith.constant 0 : i32
    return %c0_i32, %c0_i32_0 : i32, i32
  }
  func.func @transform_4(%arg0: i32) -> (i32, i32) {
    %c0_i32 = arith.constant 0 : i32
    %c0_i32_0 = arith.constant 0 : i32
    %c0_i32_1 = arith.constant 0 : i32
    return %c0_i32, %c0_i32_0 : i32, i32
  }
  func.func @transform_5(%arg0: i32) -> (i32, i32) {
    %c0_i32 = arith.constant 0 : i32
    %c0_i32_0 = arith.constant 0 : i32
    %c0_i32_1 = arith.constant 0 : i32
    return %c0_i32, %c0_i32_0 : i32, i32
  }
  func.func @transform_6(%arg0: i32) -> (i32, i32) {
    %c0_i32 = arith.constant 0 : i32
    %c0_i32_0 = arith.constant 0 : i32
    %c0_i32_1 = arith.constant 0 : i32
    return %c0_i32, %c0_i32_0 : i32, i32
  }
}

</mosaic_0001>

<llo_original>
// kernel: bidir_rnn_last_hidden.1
$region0: #{bidir_rnn_last_hidden.1}
  #allocation0 [shape = 'u32[]', space=smem, size = 0x4, offset = 0x4, fixed_abs, tag = 'smem constant byte address 0x4 - core index']
  #allocation1 [shape = 'u32[144,128]{1,0:T(1,128)}', space=vmem, size = 0x12000, scoped, tag = 'internal scratch']
  #allocation2 [shape = 'f32[32,128]{1,0:T(8,128)}', space=vmem, size = 0x4000, scoped, tag = 'scratch operand']
  #allocation3 [shape = 'f32[32,128]{1,0:T(8,128)}', space=vmem, size = 0x4000, scoped, tag = 'scratch operand']
  %s0 = inlined_call_operand.vmem [shape: f32[64,4], index: 0, kind: input, shape index: {}, may-alias: {0,1}]
  %s1 = inlined_call_operand.vmem [shape: f32[64,4], index: 1, kind: input, shape index: {}, may-alias: {0,1}]
  %s2 = inlined_call_operand.vmem [shape: f32[4,128], index: 2, kind: input, shape index: {}]
  %s3 = inlined_call_operand.vmem [shape: f32[4,128], index: 3, kind: input, shape index: {}]
  %s4 = inlined_call_operand.hbm [shape: f32[256,256], index: 4, kind: input, shape index: {}]
  %s5 = inlined_call_operand.vmem [shape: f32[1,256], index: 5, kind: input, shape index: {}]
  %s6 = inlined_call_operand.vmem [shape: f32[8,256], index: 6, kind: output, shape index: {}]
  %s7 = sld [smem:[#allocation0]]
  $region65: #{bidir_rnn_last_hidden.1} parent=0
    _
  %s9 = ssub.s32 1, %s7
  %s10 = scalar_select 0, %s9, %s7
  $region1: #{bidir_rnn_last_hidden.1} parent=0
    #allocation4 [shape = 'u8[262144]{0}', space=vmem, size = 0x40000, scoped, tag = 'input window, operand 4, single buffered']
    #allocation5 [shape = 's32[2]{0}', space=sflag, size = 0x8, scoped, tag = 'scoped memory for bidir_rnn_last_hidden.1']
    %11 = vsyncpa [#allocation5], 0
    loop: start=0, step=1, limit=4
    $region2: #{bidir_rnn_last_hidden.1} parent=1 // loop_pre_header
      _
    $region3: #{bidir_rnn_last_hidden.1} parent=1 // loop_header
      %s13 = sphi 0, %s17
      %p14 = scmp.ge.s32.totalorder %s13, 4
      %s23 = sphi 0, %s25
      %s26 = sphi 0, %s23
      %s27 = sphi 0, %s26
      %s43 = sphi 0, %s27
      %s51 = sphi 0, %s53
      %s54 = sphi 0, %s51
      %s55 = sphi 0, %s54
      %s71 = sphi 0, %s55
      %s75 = sphi 0, %s75
      %s77 = sphi 0, %s75
      %s78 = sphi 0, %s77
      %s92 = sphi 0, %s78
      %s96 = sphi 0, %s96
      %s98 = sphi 0, %s96
      %s99 = sphi 0, %s98
      %s113 = sphi 0, %s99
      %s117 = sphi 0, %s117
      %s119 = sphi 0, %s117
      %s120 = sphi 0, %s119
      %s134 = sphi 0, %s120
      %s138 = sphi 0, %s138
      %s140 = sphi 0, %s138
      %s141 = sphi 0, %s140
      %s155 = sphi 0, %s141
      %s159 = sphi 0, %s159
      %s161 = sphi 0, %s159
      %s162 = sphi 0, %s161
      %s176 = sphi 0, %s162
    $region4: #{bidir_rnn_last_hidden.1} parent=1 // loop_header_branch
      %16 = sbr.rel (%p14) target = $region8
    $region5: #{bidir_rnn_last_hidden.1} parent=1 // loop_body
      %s18 = ssub.s32 %s13, 1
      %s19 = ssub.s32 %s13, 2
      %s20 = sadd.s32 %s13, 1
      %s21 = ssub.s32 %s13, %s20
      %p22 = scmp.eq.s32.totalorder %s21, 0
      %s24 = sadd.s32 %s23, 1
      %s25 = scalar_select %p22, %s23, %s24
      %p28 = pneg %p22
      %p29 = scmp.eq.s32.totalorder %s13, 1
      %p30 = por %p28, %p29
      %p31 = scmp.ne.s32.totalorder %s23, %s26
      %p32 = scmp.eq.s32.totalorder %s13, 0
      %p33 = por %p31, %p32
      %p34 = scmp.ne.s32.totalorder %s23, %s26
      %p35 = scmp.eq.s32.totalorder %s18, 1
      %p36 = por %p34, %p35
      %p37 = scmp.ne.s32.totalorder %s26, %s27
      %p38 = scmp.eq.s32.totalorder %s18, 0
      %p39 = por %p37, %p38
      %p40 = scmp.ne.s32.totalorder %s26, %s27
      %p41 = scmp.eq.s32.totalorder %s19, 1
      %p42 = por %p40, %p41
      %p44 = scmp.ne.s32.totalorder %s27, %s43
      %p45 = scmp.eq.s32.totalorder %s19, 0
      %p46 = por %p44, %p45
      %s47 = ssub.s32 1, %s13
      %s48 = ssub.s32 1, %s20
      %s49 = ssub.s32 %s47, %s48
      %p50 = scmp.eq.s32.totalorder %s49, 0
      %s52 = sadd.s32 %s51, 1
      %s53 = scalar_select %p50, %s51, %s52
      %p56 = pneg %p50
      %p57 = scmp.eq.s32.totalorder %s13, 1
      %p58 = por %p56, %p57
      %p59 = scmp.ne.s32.totalorder %s51, %s54
      %p60 = scmp.eq.s32.totalorder %s13, 0
      %p61 = por %p59, %p60
      %p62 = scmp.ne.s32.totalorder %s51, %s54
      %p63 = scmp.eq.s32.totalorder %s18, 1
      %p64 = por %p62, %p63
      %p65 = scmp.ne.s32.totalorder %s54, %s55
      %p66 = scmp.eq.s32.totalorder %s18, 0
      %p67 = por %p65, %p66
      %p68 = scmp.ne.s32.totalorder %s54, %s55
      %p69 = scmp.eq.s32.totalorder %s19, 1
      %p70 = por %p68, %p69
      %p72 = scmp.ne.s32.totalorder %s55, %s71
      %p73 = scmp.eq.s32.totalorder %s19, 0
      %p74 = por %p72, %p73
      %s76 = sadd.s32 %s75, 1
      %p79 = scmp.eq.s32.totalorder %s13, 1
      %p80 = scmp.ne.s32.totalorder %s75, %s77
      %p81 = scmp.eq.s32.totalorder %s13, 0
      %p82 = por %p80, %p81
      %p83 = scmp.ne.s32.totalorder %s75, %s77
      %p84 = scmp.eq.s32.totalorder %s18, 1
      %p85 = por %p83, %p84
      %p86 = scmp.ne.s32.totalorder %s77, %s78
      %p87 = scmp.eq.s32.totalorder %s18, 0
      %p88 = por %p86, %p87
      %p89 = scmp.ne.s32.totalorder %s77, %s78
      %p90 = scmp.eq.s32.totalorder %s19, 1
      %p91 = por %p89, %p90
      %p93 = scmp.ne.s32.totalorder %s78, %s92
      %p94 = scmp.eq.s32.totalorder %s19, 0
      %p95 = por %p93, %p94
      %s97 = sadd.s32 %s96, 1
      %p100 = scmp.eq.s32.totalorder %s13, 1
      %p101 = scmp.ne.s32.totalorder %s96, %s98
      %p102 = scmp.eq.s32.totalorder %s13, 0
      %p103 = por %p101, %p102
      %p104 = scmp.ne.s32.totalorder %s96, %s98
      %p105 = scmp.eq.s32.totalorder %s18, 1
      %p106 = por %p104, %p105
      %p107 = scmp.ne.s32.totalorder %s98, %s99
      %p108 = scmp.eq.s32.totalorder %s18, 0
      %p109 = por %p107, %p108
      %p110 = scmp.ne.s32.totalorder %s98, %s99
      %p111 = scmp.eq.s32.totalorder %s19, 1
      %p112 = por %p110, %p111
      %p114 = scmp.ne.s32.totalorder %s99, %s113
      %p115 = scmp.eq.s32.totalorder %s19, 0
      %p116 = por %p114, %p115
      %s118 = sadd.s32 %s117, 1
      %p121 = scmp.eq.s32.totalorder %s13, 1
      %p122 = scmp.ne.s32.totalorder %s117, %s119
      %p123 = scmp.eq.s32.totalorder %s13, 0
      %p124 = por %p122, %p123
      %p125 = scmp.ne.s32.totalorder %s117, %s119
      %p126 = scmp.eq.s32.totalorder %s18, 1
      %p127 = por %p125, %p126
      %p128 = scmp.ne.s32.totalorder %s119, %s120
      %p129 = scmp.eq.s32.totalorder %s18, 0
      %p130 = por %p128, %p129
      %p131 = scmp.ne.s32.totalorder %s119, %s120
      %p132 = scmp.eq.s32.totalorder %s19, 1
      %p133 = por %p131, %p132
      %p135 = scmp.ne.s32.totalorder %s120, %s134
      %p136 = scmp.eq.s32.totalorder %s19, 0
      %p137 = por %p135, %p136
      %s139 = sadd.s32 %s138, 1
      %p142 = scmp.eq.s32.totalorder %s13, 1
      %p143 = scmp.ne.s32.totalorder %s138, %s140
      %p144 = scmp.eq.s32.totalorder %s13, 0
      %p145 = por %p143, %p144
      %p146 = scmp.ne.s32.totalorder %s138, %s140
      %p147 = scmp.eq.s32.totalorder %s18, 1
      %p148 = por %p146, %p147
      %p149 = scmp.ne.s32.totalorder %s140, %s141
      %p150 = scmp.eq.s32.totalorder %s18, 0
      %p151 = por %p149, %p150
      %p152 = scmp.ne.s32.totalorder %s140, %s141
      %p153 = scmp.eq.s32.totalorder %s19, 1
      %p154 = por %p152, %p153
      %p156 = scmp.ne.s32.totalorder %s141, %s155
      %p157 = scmp.eq.s32.totalorder %s19, 0
      %p158 = por %p156, %p157
      %s160 = sadd.s32 %s159, 1
      %p163 = scmp.eq.s32.totalorder %s13, 1
      %p164 = scmp.ne.s32.totalorder %s159, %s161
      %p165 = scmp.eq.s32.totalorder %s13, 0
      %p166 = por %p164, %p165
      %p167 = scmp.ne.s32.totalorder %s159, %s161
      %p168 = scmp.eq.s32.totalorder %s18, 1
      %p169 = por %p167, %p168
      %p170 = scmp.ne.s32.totalorder %s161, %s162
      %p171 = scmp.eq.s32.totalorder %s18, 0
      %p172 = por %p170, %p171
      %p173 = scmp.ne.s32.totalorder %s161, %s162
      %p174 = scmp.eq.s32.totalorder %s19, 1
      %p175 = por %p173, %p174
      %p177 = scmp.ne.s32.totalorder %s162, %s176
      %p178 = scmp.eq.s32.totalorder %s19, 0
      %p179 = por %p177, %p178
      %p180 = scmp.le.s32.totalorder 1, %s13
      %p181 = scmp.lt.s32.totalorder %s13, 3
      %p182 = pnand %p180, %p181
      %p183 = pneg %p182
      // Predicated region
      $region9: #{bidir_rnn_last_hidden.1} parent=5 // pred_check
        _
      $region10: #{bidir_rnn_last_hidden.1} parent=5 // pred_check_branch
        %185 = sbr.rel (%p182) target = $region12
      $region11: #{bidir_rnn_last_hidden.1} parent=5 // pred_region
        %s186 = ssub.s32 %s13, 1
        // Predicated region
        $region13: #{bidir_rnn_last_hidden.1} parent=11 // pred_check
          %p187 = pneg %p88
        $region14: #{bidir_rnn_last_hidden.1} parent=11 // pred_check_branch
          %189 = sbr.rel (%p187) target = $region16
        $region15: #{bidir_rnn_last_hidden.1} parent=11 // pred_region
          _
        $region16: #{bidir_rnn_last_hidden.1} parent=11 // pred_fallthru
          _
        // Predicated region
        $region17: #{bidir_rnn_last_hidden.1} parent=11 // pred_check
          %p190 = pneg %p109
        $region18: #{bidir_rnn_last_hidden.1} parent=11 // pred_check_branch
          %192 = sbr.rel (%p190) target = $region20
        $region19: #{bidir_rnn_last_hidden.1} parent=11 // pred_region
          _
        $region20: #{bidir_rnn_last_hidden.1} parent=11 // pred_fallthru
          _
        // Predicated region
        $region21: #{bidir_rnn_last_hidden.1} parent=11 // pred_check
          %p193 = pneg %p130
        $region22: #{bidir_rnn_last_hidden.1} parent=11 // pred_check_branch
          %195 = sbr.rel (%p193) target = $region24
        $region23: #{bidir_rnn_last_hidden.1} parent=11 // pred_region
          %s197 = ssub.s32 8192, 8192
          %198 = vsyncadd [#allocation5], %s197
          %s199 = sshll.u32 [#allocation4], 4
          %s200 = int_to_ptr.vmem [resolvable:$true] %s199
          %205 = dma.hbm_to_vmem [thread:$0]  %s4, 8192, %s200, [#allocation5], 256, 256, 16
        $region24: #{bidir_rnn_last_hidden.1} parent=11 // pred_fallthru
          _
        // Predicated region
        $region25: #{bidir_rnn_last_hidden.1} parent=11 // pred_check
          %p206 = pneg %p151
        $region26: #{bidir_rnn_last_hidden.1} parent=11 // pred_check_branch
          %208 = sbr.rel (%p206) target = $region28
        $region27: #{bidir_rnn_last_hidden.1} parent=11 // pred_region
          _
        $region28: #{bidir_rnn_last_hidden.1} parent=11 // pred_fallthru
          _
      $region12: #{bidir_rnn_last_hidden.1} parent=5 // pred_fallthru
        _
      %p209 = scmp.lt.s32.totalorder %s13, 2
      // Predicated region
      $region29: #{bidir_rnn_last_hidden.1} parent=5 // pred_check
        %p210 = pneg %p209
      $region30: #{bidir_rnn_last_hidden.1} parent=5 // pred_check_branch
        %212 = sbr.rel (%p210) target = $region32
      $region31: #{bidir_rnn_last_hidden.1} parent=5 // pred_region
        // Predicated region
        $region33: #{bidir_rnn_last_hidden.1} parent=31 // pred_check
          %p213 = pneg %p33
        $region34: #{bidir_rnn_last_hidden.1} parent=31 // pred_check_branch
          %215 = sbr.rel (%p213) target = $region36
        $region35: #{bidir_rnn_last_hidden.1} parent=31 // pred_region
          %s216 = smul.u32 4, %s13
          %p217 = scmp.lt.s32.totalorder %s216, 7
          %s218 = scalar_select %p217, %s216, 7
          %s219 = smul.addr %s218, 8
          %s220 = scalar_lea.vmem %s0, %s219
          %s221 = smul.u32 4, %s13
        $region36: #{bidir_rnn_last_hidden.1} parent=31 // pred_fallthru
          _
        // Predicated region
        $region37: #{bidir_rnn_last_hidden.1} parent=31 // pred_check
          %p222 = pneg %p61
        $region38: #{bidir_rnn_last_hidden.1} parent=31 // pred_check_branch
          %224 = sbr.rel (%p222) target = $region40
        $region39: #{bidir_rnn_last_hidden.1} parent=31 // pred_region
          %s225 = ssub.s32 1, %s13
          %s226 = smul.u32 4, %s225
          %p227 = scmp.lt.s32.totalorder %s226, 7
          %s228 = scalar_select %p227, %s226, 7
          %s229 = smul.addr %s228, 8
          %s230 = scalar_lea.vmem %s1, %s229
          %s231 = ssub.s32 1, %s13
          %s232 = smul.u32 4, %s231
        $region40: #{bidir_rnn_last_hidden.1} parent=31 // pred_fallthru
          _
      $region32: #{bidir_rnn_last_hidden.1} parent=5 // pred_fallthru
        _
      %p233 = scmp.le.s32.totalorder 1, %s13
      %p234 = scmp.lt.s32.totalorder %s13, 3
      %p235 = pnand %p233, %p234
      %p236 = pneg %p235
      // Predicated region
      $region41: #{bidir_rnn_last_hidden.1} parent=5 // pred_check
        _
      $region42: #{bidir_rnn_last_hidden.1} parent=5 // pred_check_branch
        %238 = sbr.rel (%p235) target = $region44
      $region43: #{bidir_rnn_last_hidden.1} parent=5 // pred_region
        %s239 = ssub.s32 %s13, 1
        // Predicated region
        $region45: #{bidir_rnn_last_hidden.1} parent=43 // pred_check
          %p240 = pneg %p130
        $region46: #{bidir_rnn_last_hidden.1} parent=43 // pred_check_branch
          %242 = sbr.rel (%p240) target = $region48
        $region47: #{bidir_rnn_last_hidden.1} parent=43 // pred_region
          %243 = dma.done [#allocation5], 8192
        $region48: #{bidir_rnn_last_hidden.1} parent=43 // pred_fallthru
          _
        %s244 = smul.u32 4, %s18
        %p245 = scmp.lt.s32.totalorder %s244, 7
        %s246 = scalar_select %p245, %s244, 7
        %s247 = smul.addr %s246, 8
        %s248 = scalar_lea.vmem %s0, %s247
        %p249 = pneg %p39
        %p250 = pneg %p36
        %s251 = ssub.s32 1, %s18
        %s252 = smul.u32 4, %s251
        %p253 = scmp.lt.s32.totalorder %s252, 7
        %s254 = scalar_select %p253, %s252, 7
        %s255 = smul.addr %s254, 8
        %s256 = scalar_lea.vmem %s1, %s255
        %p257 = pneg %p67
        %p258 = pneg %p64
        %p259 = pneg %p88
        %p260 = pneg %p85
        %p261 = pneg %p109
        %p262 = pneg %p106
        %p263 = pneg %p130
        %p264 = pneg %p127
        %p265 = pneg %p151
        %p266 = pneg %p148
        %p267 = pneg %p172
        %p268 = pneg %p169
        %s269 = smul.u32 4, %s18
        %p270 = scmp.lt.s32.totalorder %s269, 7
        %s271 = scalar_select %p270, %s269, 7
        %s272 = smul.addr %s271, 8
        %s273 = scalar_lea.vmem %s0, %s272
        %s274 = smul.u32 4, %s18
        %s275 = ssub.s32 1, %s18
        %s276 = smul.u32 4, %s275
        %p277 = scmp.lt.s32.totalorder %s276, 7
        %s278 = scalar_select %p277, %s276, 7
        %s279 = smul.addr %s278, 8
        %s280 = scalar_lea.vmem %s1, %s279
        %s281 = ssub.s32 1, %s18
        %s282 = smul.u32 4, %s281
        %p283 = scmp.eq.s32.totalorder %s18, 0
        // Predicated region
        $region49: #{bidir_rnn_last_hidden.1} parent=43 // pred_check
          %p284 = pneg %p283
        $region50: #{bidir_rnn_last_hidden.1} parent=43 // pred_check_branch
          %286 = sbr.rel (%p284) target = $region52
        $region51: #{bidir_rnn_last_hidden.1} parent=43 // pred_region
          %287 = vst [vmem:[%s6] sm:$0xff] 0.0
          %288 = vst [vmem:[%s6 + $0x8] sm:$0xff] 0.0
        $region52: #{bidir_rnn_last_hidden.1} parent=43 // pred_fallthru
          _
        %v289 = vld [vmem:[%s273] sm:$0xff]
        %v290 = vld [vmem:[%s273 + $0x8] sm:$0xff]
        %v291 = vld [vmem:[%s273 + $0x10] sm:$0xff]
        %v292 = vld [vmem:[%s273 + $0x18] sm:$0xff]
        %v293 = vld [vmem:[%s2] sm:$0xf]
        %v294 = vld [vmem:[%s5] sm:$0x1]
        %v296 = vlaneseq
        %v297 = vshrl.u32 %v296, 7
        %v298 = vsub.s32 0, %v297
        %v299 = vrot.slane %v294, %v298
        %vm301 = vcmask 31744
        %v303 = vsel %vm301, %v289, 0
        %v306 = vsel %vm301, %v290, 0
        %v309 = vsel %vm301, %v291, 0
        %v312 = vsel %vm301, %v292, 0
        %vm314 = vcmask 1043456
        %v316 = vsel %vm314, %v293, 0
        %318 = vmatprep.subr.mxu0 0.0
        %319 = vmatpush1.msra.mxu0 0.0
        %320 = vmatprep.subr.mxu0 0.0
        %321 = vmatpush1.msra.mxu0 0.0
        %322 = vmatprep.subr.mxu0 0.0
        %323 = vmatpush1.msra.mxu0 0.0
        %324 = vmatprep.subr.mxu0 0.0
        %325 = vmatpush1.msra.mxu0 0.0
        %326 = vmatprep.subr.mxu0 0.0
        %327 = vmatpush1.msra.mxu0 0.0
        %328 = vmatprep.subr.mxu0 0.0
        %329 = vmatpush1.msra.mxu0 0.0
        %330 = vmatprep.subr.mxu0 0.0
        %331 = vmatpush1.msra.mxu0 0.0
        %332 = vmatprep.subr.mxu0 0.0
        %333 = vmatpush1.msra.mxu0 0.0
        %334 = vmatprep.subr.mxu0 0.0
        %335 = vmatpush1.msra.mxu0 0.0
        %336 = vmatprep.subr.mxu0 0.0
        %337 = vmatpush1.msra.mxu0 0.0
        %338 = vmatprep.subr.mxu0 0.0
        %339 = vmatpush1.msra.mxu0 0.0
        %340 = vmatprep.subr.mxu0 0.0
        %341 = vmatpush1.msra.mxu0 0.0
        %342 = vmatprep.subr.mxu0 0.0
        %343 = vmatpush1.msra.mxu0 0.0
        %344 = vmatprep.subr.mxu0 0.0
        %345 = vmatpush1.msra.mxu0 0.0
        %346 = vmatprep.subr.mxu0 0.0
        %347 = vmatpush1.msra.mxu0 0.0
        %348 = vmatprep.subr.mxu0 0.0
        %349 = vmatpush1.msra.mxu0 %v316
        %350 = vmatprep.subr.mxu0 0.0
        %351 = vmatpush2.msra.mxu0 0.0
        %352 = vmatprep.subr.mxu0 0.0
        %353 = vmatpush2.msra.mxu0 0.0
        %354 = vmatprep.subr.mxu0 0.0
        %355 = vmatpush2.msra.mxu0 0.0
        %356 = vmatprep.subr.mxu0 0.0
        %357 = vmatpush2.msra.mxu0 0.0
        %358 = vmatprep.subr.mxu0 0.0
        %359 = vmatpush2.msra.mxu0 0.0
        %360 = vmatprep.subr.mxu0 0.0
        %361 = vmatpush2.msra.mxu0 0.0
        %362 = vmatprep.subr.mxu0 0.0
        %363 = vmatpush2.msra.mxu0 0.0
        %364 = vmatprep.subr.mxu0 0.0
        %365 = vmatpush2.msra.mxu0 0.0
        %366 = vmatprep.subr.mxu0 0.0
        %367 = vmatpush2.msra.mxu0 0.0
        %368 = vmatprep.subr.mxu0 0.0
        %369 = vmatpush2.msra.mxu0 0.0
        %370 = vmatprep.subr.mxu0 0.0
        %371 = vmatpush2.msra.mxu0 0.0
        %372 = vmatprep.subr.mxu0 0.0
        %373 = vmatpush2.msra.mxu0 0.0
        %374 = vmatprep.subr.mxu0 0.0
        %375 = vmatpush2.msra.mxu0 0.0
        %376 = vmatprep.subr.mxu0 0.0
        %377 = vmatpush2.msra.mxu0 0.0
        %378 = vmatprep.subr.mxu0 0.0
        %379 = vmatpush2.msra.mxu0 0.0
        %380 = vmatprep.subr.mxu0 0.0
        %381 = vmatpush2.msra.mxu0 0.0
        %382 = vmatprep.mubr.f32.mxu0 0.0
        %383 = vmatmul.mubr.f32.gmra.mxu0 %v303
        %v384 = vpop.f32.mrf.mxu0
        %v385 = vadd.f32 %v299, %v384
        %v386 = vpop.f32.mrf.mxu0
        %387 = vmatprep.mubr.f32.mxu0 0.0
        %388 = vmatmul.mubr.f32.gmra.mxu0 %v306
        %v389 = vpop.f32.mrf.mxu0
        %v390 = vadd.f32 %v299, %v389
        %v391 = vpop.f32.mrf.mxu0
        %392 = vmatprep.mubr.f32.mxu0 0.0
        %393 = vmatmul.mubr.f32.gmra.mxu0 %v309
        %v394 = vpop.f32.mrf.mxu0
        %v395 = vadd.f32 %v299, %v394
        %v396 = vpop.f32.mrf.mxu0
        %397 = vmatprep.mubr.f32.mxu0 0.0
        %398 = vmatmul.mubr.f32.gmra.mxu0 %v312
        %v399 = vpop.f32.mrf.mxu0
        %v400 = vadd.f32 %v299, %v399
        %v401 = vpop.f32.mrf.mxu0
        %402 = vdwg.mxu0
        %403 = vst [vmem:[#allocation2] sm:$0xff] %v385
        %404 = vst [vmem:[#allocation2 + $0x8] sm:$0xff] %v390
        %405 = vst [vmem:[#allocation2 + $0x10] sm:$0xff] %v395
        %406 = vst [vmem:[#allocation2 + $0x18] sm:$0xff] %v400
        %v407 = vld [vmem:[%s280] sm:$0xff]
        %v408 = vld [vmem:[%s280 + $0x8] sm:$0xff]
        %v409 = vld [vmem:[%s280 + $0x10] sm:$0xff]
        %v410 = vld [vmem:[%s280 + $0x18] sm:$0xff]
        %v411 = vld [vmem:[%s3] sm:$0xf]
        %v412 = vld [vmem:[%s5 + $0x1] sm:$0x1]
        %v414 = vlaneseq
        %v415 = vshrl.u32 %v414, 7
        %v416 = vsub.s32 0, %v415
        %v417 = vrot.slane %v412, %v416
        %v420 = vsel %vm301, %v407, 0
        %v423 = vsel %vm301, %v408, 0
        %v426 = vsel %vm301, %v409, 0
        %v429 = vsel %vm301, %v410, 0
        %v432 = vsel %vm314, %v411, 0
        %434 = vmatprep.subr.mxu0 0.0
        %435 = vmatpush1.msra.mxu0 0.0
        %436 = vmatprep.subr.mxu0 0.0
        %437 = vmatpush1.msra.mxu0 0.0
        %438 = vmatprep.subr.mxu0 0.0
        %439 = vmatpush1.msra.mxu0 0.0
        %440 = vmatprep.subr.mxu0 0.0
        %441 = vmatpush1.msra.mxu0 0.0
        %442 = vmatprep.subr.mxu0 0.0
        %443 = vmatpush1.msra.mxu0 0.0
        %444 = vmatprep.subr.mxu0 0.0
        %445 = vmatpush1.msra.mxu0 0.0
        %446 = vmatprep.subr.mxu0 0.0
        %447 = vmatpush1.msra.mxu0 0.0
        %448 = vmatprep.subr.mxu0 0.0
        %449 = vmatpush1.msra.mxu0 0.0
        %450 = vmatprep.subr.mxu0 0.0
        %451 = vmatpush1.msra.mxu0 0.0
        %452 = vmatprep.subr.mxu0 0.0
        %453 = vmatpush1.msra.mxu0 0.0
        %454 = vmatprep.subr.mxu0 0.0
        %455 = vmatpush1.msra.mxu0 0.0
        %456 = vmatprep.subr.mxu0 0.0
        %457 = vmatpush1.msra.mxu0 0.0
        %458 = vmatprep.subr.mxu0 0.0
        %459 = vmatpush1.msra.mxu0 0.0
        %460 = vmatprep.subr.mxu0 0.0
        %461 = vmatpush1.msra.mxu0 0.0
        %462 = vmatprep.subr.mxu0 0.0
        %463 = vmatpush1.msra.mxu0 0.0
        %464 = vmatprep.subr.mxu0 0.0
        %465 = vmatpush1.msra.mxu0 %v432
        %466 = vmatprep.subr.mxu0 0.0
        %467 = vmatpush2.msra.mxu0 0.0
        %468 = vmatprep.subr.mxu0 0.0
        %469 = vmatpush2.msra.mxu0 0.0
        %470 = vmatprep.subr.mxu0 0.0
        %471 = vmatpush2.msra.mxu0 0.0
        %472 = vmatprep.subr.mxu0 0.0
        %473 = vmatpush2.msra.mxu0 0.0
        %474 = vmatprep.subr.mxu0 0.0
        %475 = vmatpush2.msra.mxu0 0.0
        %476 = vmatprep.subr.mxu0 0.0
        %477 = vmatpush2.msra.mxu0 0.0
        %478 = vmatprep.subr.mxu0 0.0
        %479 = vmatpush2.msra.mxu0 0.0
        %480 = vmatprep.subr.mxu0 0.0
        %481 = vmatpush2.msra.mxu0 0.0
        %482 = vmatprep.subr.mxu0 0.0
        %483 = vmatpush2.msra.mxu0 0.0
        %484 = vmatprep.subr.mxu0 0.0
        %485 = vmatpush2.msra.mxu0 0.0
        %486 = vmatprep.subr.mxu0 0.0
        %487 = vmatpush2.msra.mxu0 0.0
        %488 = vmatprep.subr.mxu0 0.0
        %489 = vmatpush2.msra.mxu0 0.0
        %490 = vmatprep.subr.mxu0 0.0
        %491 = vmatpush2.msra.mxu0 0.0
        %492 = vmatprep.subr.mxu0 0.0
        %493 = vmatpush2.msra.mxu0 0.0
        %494 = vmatprep.subr.mxu0 0.0
        %495 = vmatpush2.msra.mxu0 0.0
        %496 = vmatprep.subr.mxu0 0.0
        %497 = vmatpush2.msra.mxu0 0.0
        %498 = vmatprep.mubr.f32.mxu0 0.0
        %499 = vmatmul.mubr.f32.gmra.mxu0 %v420
        %v500 = vpop.f32.mrf.mxu0
        %v501 = vadd.f32 %v417, %v500
        %v502 = vpop.f32.mrf.mxu0
        %503 = vmatprep.mubr.f32.mxu0 0.0
        %504 = vmatmul.mubr.f32.gmra.mxu0 %v423
        %v505 = vpop.f32.mrf.mxu0
        %v506 = vadd.f32 %v417, %v505
        %v507 = vpop.f32.mrf.mxu0
        %508 = vmatprep.mubr.f32.mxu0 0.0
        %509 = vmatmul.mubr.f32.gmra.mxu0 %v426
        %v510 = vpop.f32.mrf.mxu0
        %v511 = vadd.f32 %v417, %v510
        %v512 = vpop.f32.mrf.mxu0
        %513 = vmatprep.mubr.f32.mxu0 0.0
        %514 = vmatmul.mubr.f32.gmra.mxu0 %v429
        %v515 = vpop.f32.mrf.mxu0
        %v516 = vadd.f32 %v417, %v515
        %v517 = vpop.f32.mrf.mxu0
        %518 = vdwg.mxu0
        %519 = vst [vmem:[#allocation3] sm:$0xff] %v501
        %520 = vst [vmem:[#allocation3 + $0x8] sm:$0xff] %v506
        %521 = vst [vmem:[#allocation3 + $0x10] sm:$0xff] %v511
        %522 = vst [vmem:[#allocation3 + $0x18] sm:$0xff] %v516
        %v523 = vld [vmem:[#allocation4] sm:$0xff]
        %v524 = vld [vmem:[#allocation4 + $0x8] sm:$0xff]
        %v525 = vld [vmem:[#allocation4 + $0x10] sm:$0xff]
        %v526 = vld [vmem:[#allocation4 + $0x18] sm:$0xff]
        %v527 = vld [vmem:[#allocation4 + $0x20] sm:$0xff]
        %v528 = vld [vmem:[#allocation4 + $0x28] sm:$0xff]
        %v529 = vld [vmem:[#allocation4 + $0x30] sm:$0xff]
        %v530 = vld [vmem:[#allocation4 + $0x38] sm:$0xff]
        %v531 = vld [vmem:[#allocation4 + $0x40] sm:$0xff]
        %v532 = vld [vmem:[#allocation4 + $0x48] sm:$0xff]
        %v533 = vld [vmem:[#allocation4 + $0x50] sm:$0xff]
        %v534 = vld [vmem:[#allocation4 + $0x58] sm:$0xff]
        %v535 = vld [vmem:[#allocation4 + $0x60] sm:$0xff]
        %v536 = vld [vmem:[#allocation4 + $0x68] sm:$0xff]
        %v537 = vld [vmem:[#allocation4 + $0x70] sm:$0xff]
        %v538 = vld [vmem:[#allocation4 + $0x78] sm:$0xff]
        %v539 = vld [vmem:[#allocation4 + $0x80] sm:$0xff]
        %v540 = vld [vmem:[#allocation4 + $0x88] sm:$0xff]
        %v541 = vld [vmem:[#allocation4 + $0x90] sm:$0xff]
        %v542 = vld [vmem:[#allocation4 + $0x98] sm:$0xff]
        %v543 = vld [vmem:[#allocation4 + $0xa0] sm:$0xff]
        %v544 = vld [vmem:[#allocation4 + $0xa8] sm:$0xff]
        %v545 = vld [vmem:[#allocation4 + $0xb0] sm:$0xff]
        %v546 = vld [vmem:[#allocation4 + $0xb8] sm:$0xff]
        %v547 = vld [vmem:[#allocation4 + $0xc0] sm:$0xff]
        %v548 = vld [vmem:[#allocation4 + $0xc8] sm:$0xff]
        %v549 = vld [vmem:[#allocation4 + $0xd0] sm:$0xff]
        %v550 = vld [vmem:[#allocation4 + $0xd8] sm:$0xff]
        %v551 = vld [vmem:[#allocation4 + $0xe0] sm:$0xff]
        %v552 = vld [vmem:[#allocation4 + $0xe8] sm:$0xff]
        %v553 = vld [vmem:[#allocation4 + $0xf0] sm:$0xff]
        %v554 = vld [vmem:[#allocation4 + $0xf8] sm:$0xff]
        %v555 = vld [vmem:[#allocation4 + $0x100] sm:$0xff]
        %v556 = vld [vmem:[#allocation4 + $0x108] sm:$0xff]
        %v557 = vld [vmem:[#allocation4 + $0x110] sm:$0xff]
        %v558 = vld [vmem:[#allocation4 + $0x118] sm:$0xff]
        %v559 = vld [vmem:[#allocation4 + $0x120] sm:$0xff]
        %v560 = vld [vmem:[#allocation4 + $0x128] sm:$0xff]
        %v561 = vld [vmem:[#allocation4 + $0x130] sm:$0xff]
        %v562 = vld [vmem:[#allocation4 + $0x138] sm:$0xff]
        %v563 = vld [vmem:[#allocation4 + $0x140] sm:$0xff]
        %v564 = vld [vmem:[#allocation4 + $0x148] sm:$0xff]
        %v565 = vld [vmem:[#allocation4 + $0x150] sm:$0xff]
        %v566 = vld [vmem:[#allocation4 + $0x158] sm:$0xff]
        %v567 = vld [vmem:[#allocation4 + $0x160] sm:$0xff]
        %v568 = vld [vmem:[#allocation4 + $0x168] sm:$0xff]
        %v569 = vld [vmem:[#allocation4 + $0x170] sm:$0xff]
        %v570 = vld [vmem:[#allocation4 + $0x178] sm:$0xff]
        %v571 = vld [vmem:[#allocation4 + $0x180] sm:$0xff]
        %v572 = vld [vmem:[#allocation4 + $0x188] sm:$0xff]
        %v573 = vld [vmem:[#allocation4 + $0x190] sm:$0xff]
        %v574 = vld [vmem:[#allocation4 + $0x198] sm:$0xff]
        %v575 = vld [vmem:[#allocation4 + $0x1a0] sm:$0xff]
        %v576 = vld [vmem:[#allocation4 + $0x1a8] sm:$0xff]
        %v577 = vld [vmem:[#allocation4 + $0x1b0] sm:$0xff]
        %v578 = vld [vmem:[#allocation4 + $0x1b8] sm:$0xff]
        %v579 = vld [vmem:[#allocation4 + $0x1c0] sm:$0xff]
        %v580 = vld [vmem:[#allocation4 + $0x1c8] sm:$0xff]
        %v581 = vld [vmem:[#allocation4 + $0x1d0] sm:$0xff]
        %v582 = vld [vmem:[#allocation4 + $0x1d8] sm:$0xff]
        %v583 = vld [vmem:[#allocation4 + $0x1e0] sm:$0xff]
        %v584 = vld [vmem:[#allocation4 + $0x1e8] sm:$0xff]
        %v585 = vld [vmem:[#allocation4 + $0x1f0] sm:$0xff]
        %v586 = vld [vmem:[#allocation4 + $0x1f8] sm:$0xff]
        %v587 = vld [vmem:[%s6] sm:$0xff]
        %v588 = vld [vmem:[%s6 + $0x8] sm:$0xff]
        %v589 = vld [vmem:[#allocation2] sm:$0xff]
        %s590 = scalar_lea.vmem [#allocation3], 24
        %v591 = vld [vmem:[%s590] sm:$0xff]
        %592 = vmatprep.subr.mxu0 %v554
        %593 = vmatpush1.msra.mxu0 %v553
        %594 = vmatprep.subr.mxu0 %v552
        %595 = vmatpush1.msra.mxu0 %v551
        %596 = vmatprep.subr.mxu0 %v550
        %597 = vmatpush1.msra.mxu0 %v549
        %598 = vmatprep.subr.mxu0 %v548
        %599 = vmatpush1.msra.mxu0 %v547
        %600 = vmatprep.subr.mxu0 %v546
        %601 = vmatpush1.msra.mxu0 %v545
        %602 = vmatprep.subr.mxu0 %v544
        %603 = vmatpush1.msra.mxu0 %v543
        %604 = vmatprep.subr.mxu0 %v542
        %605 = vmatpush1.msra.mxu0 %v541
        %606 = vmatprep.subr.mxu0 %v540
        %607 = vmatpush1.msra.mxu0 %v539
        %608 = vmatprep.subr.mxu0 %v538
        %609 = vmatpush1.msra.mxu0 %v537
        %610 = vmatprep.subr.mxu0 %v536
        %611 = vmatpush1.msra.mxu0 %v535
        %612 = vmatprep.subr.mxu0 %v534
        %613 = vmatpush1.msra.mxu0 %v533
        %614 = vmatprep.subr.mxu0 %v532
        %615 = vmatpush1.msra.mxu0 %v531
        %616 = vmatprep.subr.mxu0 %v530
        %617 = vmatpush1.msra.mxu0 %v529
        %618 = vmatprep.subr.mxu0 %v528
        %619 = vmatpush1.msra.mxu0 %v527
        %620 = vmatprep.subr.mxu0 %v526
        %621 = vmatpush1.msra.mxu0 %v525
        %622 = vmatprep.subr.mxu0 %v524
        %623 = vmatpush1.msra.mxu0 %v523
        %624 = vmatprep.subr.mxu0 %v586
        %625 = vmatpush2.msra.mxu0 %v585
        %626 = vmatprep.subr.mxu0 %v584
        %627 = vmatpush2.msra.mxu0 %v583
        %628 = vmatprep.subr.mxu0 %v582
        %629 = vmatpush2.msra.mxu0 %v581
        %630 = vmatprep.subr.mxu0 %v580
        %631 = vmatpush2.msra.mxu0 %v579
        %632 = vmatprep.subr.mxu0 %v578
        %633 = vmatpush2.msra.mxu0 %v577
        %634 = vmatprep.subr.mxu0 %v576
        %635 = vmatpush2.msra.mxu0 %v575
        %636 = vmatprep.subr.mxu0 %v574
        %637 = vmatpush2.msra.mxu0 %v573
        %638 = vmatprep.subr.mxu0 %v572
        %639 = vmatpush2.msra.mxu0 %v571
        %640 = vmatprep.subr.mxu0 %v570
        %641 = vmatpush2.msra.mxu0 %v569
        %642 = vmatprep.subr.mxu0 %v568
        %643 = vmatpush2.msra.mxu0 %v567
        %644 = vmatprep.subr.mxu0 %v566
        %645 = vmatpush2.msra.mxu0 %v565
        %646 = vmatprep.subr.mxu0 %v564
        %647 = vmatpush2.msra.mxu0 %v563
        %648 = vmatprep.subr.mxu0 %v562
        %649 = vmatpush2.msra.mxu0 %v561
        %650 = vmatprep.subr.mxu0 %v560
        %651 = vmatpush2.msra.mxu0 %v559
        %652 = vmatprep.subr.mxu0 %v558
        %653 = vmatpush2.msra.mxu0 %v557
        %654 = vmatprep.subr.mxu0 %v556
        %655 = vmatpush2.msra.mxu0 %v555
        %656 = vmatprep.mubr.f32.mxu0 %v588
        %657 = vmatmul.mubr.f32.gmra.mxu0 %v587
        %v658 = vpop.f32.mrf.mxu0
        %v659 = vadd.f32 0.0, %v658
        %v660 = vpop.f32.mrf.mxu0
        %v661 = vadd.f32 0.0, %v660
        %662 = vdwg.mxu0
        %v663 = vadd.f32 %v589, %v659
        %v664 = vadd.f32 %v591, %v661
        %v665 = vtanh.pop %v663
        %v666 = vtanh.pop %v664
        %s667 = scalar_lea.vmem [#allocation2], 8
        %v668 = vld [vmem:[%s667] sm:$0xff]
        %s669 = scalar_lea.vmem [#allocation3], 16
        %v670 = vld [vmem:[%s669] sm:$0xff]
        %671 = vmatprep.subr.mxu0 %v554
        %672 = vmatpush1.msra.mxu0 %v553
        %673 = vmatprep.subr.mxu0 %v552
        %674 = vmatpush1.msra.mxu0 %v551
        %675 = vmatprep.subr.mxu0 %v550
        %676 = vmatpush1.msra.mxu0 %v549
        %677 = vmatprep.subr.mxu0 %v548
        %678 = vmatpush1.msra.mxu0 %v547
        %679 = vmatprep.subr.mxu0 %v546
        %680 = vmatpush1.msra.mxu0 %v545
        %681 = vmatprep.subr.mxu0 %v544
        %682 = vmatpush1.msra.mxu0 %v543
        %683 = vmatprep.subr.mxu0 %v542
        %684 = vmatpush1.msra.mxu0 %v541
        %685 = vmatprep.subr.mxu0 %v540
        %686 = vmatpush1.msra.mxu0 %v539
        %687 = vmatprep.subr.mxu0 %v538
        %688 = vmatpush1.msra.mxu0 %v537
        %689 = vmatprep.subr.mxu0 %v536
        %690 = vmatpush1.msra.mxu0 %v535
        %691 = vmatprep.subr.mxu0 %v534
        %692 = vmatpush1.msra.mxu0 %v533
        %693 = vmatprep.subr.mxu0 %v532
        %694 = vmatpush1.msra.mxu0 %v531
        %695 = vmatprep.subr.mxu0 %v530
        %696 = vmatpush1.msra.mxu0 %v529
        %697 = vmatprep.subr.mxu0 %v528
        %698 = vmatpush1.msra.mxu0 %v527
        %699 = vmatprep.subr.mxu0 %v526
        %700 = vmatpush1.msra.mxu0 %v525
        %701 = vmatprep.subr.mxu0 %v524
        %702 = vmatpush1.msra.mxu0 %v523
        %703 = vmatprep.subr.mxu0 %v586
        %704 = vmatpush2.msra.mxu0 %v585
        %705 = vmatprep.subr.mxu0 %v584
        %706 = vmatpush2.msra.mxu0 %v583
        %707 = vmatprep.subr.mxu0 %v582
        %708 = vmatpush2.msra.mxu0 %v581
        %709 = vmatprep.subr.mxu0 %v580
        %710 = vmatpush2.msra.mxu0 %v579
        %711 = vmatprep.subr.mxu0 %v578
        %712 = vmatpush2.msra.mxu0 %v577
        %713 = vmatprep.subr.mxu0 %v576
        %714 = vmatpush2.msra.mxu0 %v575
        %715 = vmatprep.subr.mxu0 %v574
        %716 = vmatpush2.msra.mxu0 %v573
        %717 = vmatprep.subr.mxu0 %v572
        %718 = vmatpush2.msra.mxu0 %v571
        %719 = vmatprep.subr.mxu0 %v570
        %720 = vmatpush2.msra.mxu0 %v569
        %721 = vmatprep.subr.mxu0 %v568
        %722 = vmatpush2.msra.mxu0 %v567
        %723 = vmatprep.subr.mxu0 %v566
        %724 = vmatpush2.msra.mxu0 %v565
        %725 = vmatprep.subr.mxu0 %v564
        %726 = vmatpush2.msra.mxu0 %v563
        %727 = vmatprep.subr.mxu0 %v562
        %728 = vmatpush2.msra.mxu0 %v561
        %729 = vmatprep.subr.mxu0 %v560
        %730 = vmatpush2.msra.mxu0 %v559
        %731 = vmatprep.subr.mxu0 %v558
        %732 = vmatpush2.msra.mxu0 %v557
        %733 = vmatprep.subr.mxu0 %v556
        %734 = vmatpush2.msra.mxu0 %v555
        %735 = vmatprep.mubr.f32.mxu0 %v666
        %736 = vmatmul.mubr.f32.gmra.mxu0 %v665
        %v737 = vpop.f32.mrf.mxu0
        %v738 = vadd.f32 0.0, %v737
        %v739 = vpop.f32.mrf.mxu0
        %v740 = vadd.f32 0.0, %v739
        %741 = vdwg.mxu0
        %v742 = vadd.f32 %v668, %v738
        %v743 = vadd.f32 %v670, %v740
        %v744 = vtanh.pop %v742
        %v745 = vtanh.pop %v743
        %s746 = scalar_lea.vmem [#allocation2], 16
        %v747 = vld [vmem:[%s746] sm:$0xff]
        %s748 = scalar_lea.vmem [#allocation3], 8
        %v749 = vld [vmem:[%s748] sm:$0xff]
        %750 = vmatprep.subr.mxu0 %v554
        %751 = vmatpush1.msra.mxu0 %v553
        %752 = vmatprep.subr.mxu0 %v552
        %753 = vmatpush1.msra.mxu0 %v551
        %754 = vmatprep.subr.mxu0 %v550
        %755 = vmatpush1.msra.mxu0 %v549
        %756 = vmatprep.subr.mxu0 %v548
        %757 = vmatpush1.msra.mxu0 %v547
        %758 = vmatprep.subr.mxu0 %v546
        %759 = vmatpush1.msra.mxu0 %v545
        %760 = vmatprep.subr.mxu0 %v544
        %761 = vmatpush1.msra.mxu0 %v543
        %762 = vmatprep.subr.mxu0 %v542
        %763 = vmatpush1.msra.mxu0 %v541
        %764 = vmatprep.subr.mxu0 %v540
        %765 = vmatpush1.msra.mxu0 %v539
        %766 = vmatprep.subr.mxu0 %v538
        %767 = vmatpush1.msra.mxu0 %v537
        %768 = vmatprep.subr.mxu0 %v536
        %769 = vmatpush1.msra.mxu0 %v535
        %770 = vmatprep.subr.mxu0 %v534
        %771 = vmatpush1.msra.mxu0 %v533
        %772 = vmatprep.subr.mxu0 %v532
        %773 = vmatpush1.msra.mxu0 %v531
        %774 = vmatprep.subr.mxu0 %v530
        %775 = vmatpush1.msra.mxu0 %v529
        %776 = vmatprep.subr.mxu0 %v528
        %777 = vmatpush1.msra.mxu0 %v527
        %778 = vmatprep.subr.mxu0 %v526
        %779 = vmatpush1.msra.mxu0 %v525
        %780 = vmatprep.subr.mxu0 %v524
        %781 = vmatpush1.msra.mxu0 %v523
        %782 = vmatprep.subr.mxu0 %v586
        %783 = vmatpush2.msra.mxu0 %v585
        %784 = vmatprep.subr.mxu0 %v584
        %785 = vmatpush2.msra.mxu0 %v583
        %786 = vmatprep.subr.mxu0 %v582
        %787 = vmatpush2.msra.mxu0 %v581
        %788 = vmatprep.subr.mxu0 %v580
        %789 = vmatpush2.msra.mxu0 %v579
        %790 = vmatprep.subr.mxu0 %v578
        %791 = vmatpush2.msra.mxu0 %v577
        %792 = vmatprep.subr.mxu0 %v576
        %793 = vmatpush2.msra.mxu0 %v575
        %794 = vmatprep.subr.mxu0 %v574
        %795 = vmatpush2.msra.mxu0 %v573
        %796 = vmatprep.subr.mxu0 %v572
        %797 = vmatpush2.msra.mxu0 %v571
        %798 = vmatprep.subr.mxu0 %v570
        %799 = vmatpush2.msra.mxu0 %v569
        %800 = vmatprep.subr.mxu0 %v568
        %801 = vmatpush2.msra.mxu0 %v567
        %802 = vmatprep.subr.mxu0 %v566
        %803 = vmatpush2.msra.mxu0 %v565
        %804 = vmatprep.subr.mxu0 %v564
        %805 = vmatpush2.msra.mxu0 %v563
        %806 = vmatprep.subr.mxu0 %v562
        %807 = vmatpush2.msra.mxu0 %v561
        %808 = vmatprep.subr.mxu0 %v560
        %809 = vmatpush2.msra.mxu0 %v559
        %810 = vmatprep.subr.mxu0 %v558
        %811 = vmatpush2.msra.mxu0 %v557
        %812 = vmatprep.subr.mxu0 %v556
        %813 = vmatpush2.msra.mxu0 %v555
        %814 = vmatprep.mubr.f32.mxu0 %v745
        %815 = vmatmul.mubr.f32.gmra.mxu0 %v744
        %v816 = vpop.f32.mrf.mxu0
        %v817 = vadd.f32 0.0, %v816
        %v818 = vpop.f32.mrf.mxu0
        %v819 = vadd.f32 0.0, %v818
        %820 = vdwg.mxu0
        %v821 = vadd.f32 %v747, %v817
        %v822 = vadd.f32 %v749, %v819
        %v823 = vtanh.pop %v821
        %v824 = vtanh.pop %v822
        %s825 = scalar_lea.vmem [#allocation2], 24
        %v826 = vld [vmem:[%s825] sm:$0xff]
        %v827 = vld [vmem:[#allocation3] sm:$0xff]
        %828 = vmatprep.subr.mxu0 %v554
        %829 = vmatpush1.msra.mxu0 %v553
        %830 = vmatprep.subr.mxu0 %v552
        %831 = vmatpush1.msra.mxu0 %v551
        %832 = vmatprep.subr.mxu0 %v550
        %833 = vmatpush1.msra.mxu0 %v549
        %834 = vmatprep.subr.mxu0 %v548
        %835 = vmatpush1.msra.mxu0 %v547
        %836 = vmatprep.subr.mxu0 %v546
        %837 = vmatpush1.msra.mxu0 %v545
        %838 = vmatprep.subr.mxu0 %v544
        %839 = vmatpush1.msra.mxu0 %v543
        %840 = vmatprep.subr.mxu0 %v542
        %841 = vmatpush1.msra.mxu0 %v541
        %842 = vmatprep.subr.mxu0 %v540
        %843 = vmatpush1.msra.mxu0 %v539
        %844 = vmatprep.subr.mxu0 %v538
        %845 = vmatpush1.msra.mxu0 %v537
        %846 = vmatprep.subr.mxu0 %v536
        %847 = vmatpush1.msra.mxu0 %v535
        %848 = vmatprep.subr.mxu0 %v534
        %849 = vmatpush1.msra.mxu0 %v533
        %850 = vmatprep.subr.mxu0 %v532
        %851 = vmatpush1.msra.mxu0 %v531
        %852 = vmatprep.subr.mxu0 %v530
        %853 = vmatpush1.msra.mxu0 %v529
        %854 = vmatprep.subr.mxu0 %v528
        %855 = vmatpush1.msra.mxu0 %v527
        %856 = vmatprep.subr.mxu0 %v526
        %857 = vmatpush1.msra.mxu0 %v525
        %858 = vmatprep.subr.mxu0 %v524
        %859 = vmatpush1.msra.mxu0 %v523
        %860 = vmatprep.subr.mxu0 %v586
        %861 = vmatpush2.msra.mxu0 %v585
        %862 = vmatprep.subr.mxu0 %v584
        %863 = vmatpush2.msra.mxu0 %v583
        %864 = vmatprep.subr.mxu0 %v582
        %865 = vmatpush2.msra.mxu0 %v581
        %866 = vmatprep.subr.mxu0 %v580
        %867 = vmatpush2.msra.mxu0 %v579
        %868 = vmatprep.subr.mxu0 %v578
        %869 = vmatpush2.msra.mxu0 %v577
        %870 = vmatprep.subr.mxu0 %v576
        %871 = vmatpush2.msra.mxu0 %v575
        %872 = vmatprep.subr.mxu0 %v574
        %873 = vmatpush2.msra.mxu0 %v573
        %874 = vmatprep.subr.mxu0 %v572
        %875 = vmatpush2.msra.mxu0 %v571
        %876 = vmatprep.subr.mxu0 %v570
        %877 = vmatpush2.msra.mxu0 %v569
        %878 = vmatprep.subr.mxu0 %v568
        %879 = vmatpush2.msra.mxu0 %v567
        %880 = vmatprep.subr.mxu0 %v566
        %881 = vmatpush2.msra.mxu0 %v565
        %882 = vmatprep.subr.mxu0 %v564
        %883 = vmatpush2.msra.mxu0 %v563
        %884 = vmatprep.subr.mxu0 %v562
        %885 = vmatpush2.msra.mxu0 %v561
        %886 = vmatprep.subr.mxu0 %v560
        %887 = vmatpush2.msra.mxu0 %v559
        %888 = vmatprep.subr.mxu0 %v558
        %889 = vmatpush2.msra.mxu0 %v557
        %890 = vmatprep.subr.mxu0 %v556
        %891 = vmatpush2.msra.mxu0 %v555
        %892 = vmatprep.mubr.f32.mxu0 %v824
        %893 = vmatmul.mubr.f32.gmra.mxu0 %v823
        %v894 = vpop.f32.mrf.mxu0
        %v895 = vadd.f32 0.0, %v894
        %v896 = vpop.f32.mrf.mxu0
        %v897 = vadd.f32 0.0, %v896
        %898 = vdwg.mxu0
        %v899 = vadd.f32 %v826, %v895
        %v900 = vadd.f32 %v827, %v897
        %v901 = vtanh.pop %v899
        %v902 = vtanh.pop %v900
        %903 = vst [vmem:[%s6] sm:$0xff] %v901
        %904 = vst [vmem:[%s6 + $0x8] sm:$0xff] %v902
        // Predicated region
        $region53: #{bidir_rnn_last_hidden.1} parent=43 // pred_check
          %p905 = pneg %p169
        $region54: #{bidir_rnn_last_hidden.1} parent=43 // pred_check_branch
          %907 = sbr.rel (%p905) target = $region56
        $region55: #{bidir_rnn_last_hidden.1} parent=43 // pred_region
          _
        $region56: #{bidir_rnn_last_hidden.1} parent=43 // pred_fallthru
          _
        // Predicated region
        $region57: #{bidir_rnn_last_hidden.1} parent=43 // pred_check
          %p908 = pneg %p169
        $region58: #{bidir_rnn_last_hidden.1} parent=43 // pred_check_branch
          %910 = sbr.rel (%p908) target = $region60
        $region59: #{bidir_rnn_last_hidden.1} parent=43 // pred_region
          _
        $region60: #{bidir_rnn_last_hidden.1} parent=43 // pred_fallthru
          _
      $region44: #{bidir_rnn_last_hidden.1} parent=5 // pred_fallthru
        _
      %p911 = scmp.le.s32.totalorder 2, %s13
      // Predicated region
      $region61: #{bidir_rnn_last_hidden.1} parent=5 // pred_check
        %p912 = pneg %p911
      $region62: #{bidir_rnn_last_hidden.1} parent=5 // pred_check_branch
        %914 = sbr.rel (%p912) target = $region64
      $region63: #{bidir_rnn_last_hidden.1} parent=5 // pred_region
        %s915 = ssub.s32 %s13, 2
      $region64: #{bidir_rnn_last_hidden.1} parent=5 // pred_fallthru
        _
    $region6: #{bidir_rnn_last_hidden.1} parent=1 // loop_footer
      %s17 = sadd.s32 1, %s13
    $region7: #{bidir_rnn_last_hidden.1} parent=1 // loop_footer_branch
      %12 = sbr.rel target = $region3
    $region8: #{bidir_rnn_last_hidden.1} parent=1 // loop_exit
      _
    %916 = vsyncpa [#allocation5], 1
    %s917 = scalar_lea.sflag [#allocation5], 1
    %918 = vsyncpa %s917, 1

</llo_original>
